<compile_context>
chip_gen: v7x
topology: tpu7x:2x2x1
jax: 0.10.0
libtpu: 0.0.40
codegen_flags: <defaults>
</compile_context>

<pallas_src>
import jax
import jax.numpy as jnp
from jax.experimental import pallas as pl
from jax.experimental.pallas import tpu as pltpu

_LANES = 128
# Packed sublane tile per element size (bytes): f32 -> 8, bf16/f16 -> 16, i8/fp8 -> 32.
_SUBLANE_TILE = {4: 8, 2: 16, 1: 32}
# Candidate lane widths (all multiples of 128, widest first).
_COL_CANDIDATES = (2048, 1024, 512, 256, 128)


def _min_kernel(a_ref, b_ref, o_ref):
    # Elementwise hot path: min(a + a, b + b).
    a = a_ref[...]
    b = b_ref[...]
    o_ref[...] = jnp.minimum(a + a, b + b)


def _xla_fallback(a, b):
    # Single fused HBM pass under XLA; used for tiny / non-aligned inputs.
    return jnp.minimum(a + a, b + b)


def simple_min(a, b, *, block_bytes=4 * 1024 * 1024,
               small_fallback_elems=1 << 16):
    """Pallas implementation of SimpleMinModule.forward: min(a + a, b + b)."""
    # Robustness: mismatched shapes/dtypes or unsupported element sizes go to
    # the fused XLA path (which also handles broadcasting like torch.min).
    if a.shape != b.shape or a.dtype != b.dtype:
        return _xla_fallback(a, b)

    itemsize = jnp.dtype(a.dtype).itemsize
    if itemsize not in _SUBLANE_TILE:
        return _xla_fallback(a, b)

    orig_shape = a.shape
    n = a.size

    # Small inputs: pallas_call dispatch + single-grid-step overhead dominates;
    # a fused XLA elementwise op is strictly faster.
    if n == 0 or n < small_fallback_elems:
        return _xla_fallback(a, b)

    # Pick the widest lane width that divides n exactly -> zero padding, zero
    # trailing-slice passes, fully unmasked lane-dense stores.
    cols = 0
    for c in _COL_CANDIDATES:
        if n % c == 0:
            cols = c
            break
    if cols == 0:
        # Not 128-divisible: the fused XLA path (one HBM pass) beats any
        # kernel + pad/concat scheme (which would cost extra full passes).
        return _xla_fallback(a, b)

    rows = n // cols
    sub = _SUBLANE_TILE[itemsize]

    # Row-block size from the per-array byte budget (multiple of the sublane tile).
    block_rows = max(sub, (block_bytes // (cols * itemsize)) // sub * sub)

    # Guarantee >= 2 grid steps whenever the row count allows it so the
    # ("parallel",) grid axis shards across v7x's two TensorCores.
    if rows >= 2 * sub:
        half = ((rows + 1) // 2 + sub - 1) // sub * sub
        block_rows = min(block_rows, half)
    block_rows = min(block_rows, rows)
    # Invariant: block_rows is either a multiple of `sub` or equal to `rows`
    # (full dim), satisfying the (sublane, 128) tiling rule. A partial trailing
    # block (when block_rows does not divide rows) is handled by Pallas masking.

    grid = (pl.cdiv(rows, block_rows),)

    a2 = a.reshape(rows, cols)
    b2 = b.reshape(rows, cols)

    out = pl.pallas_call(
        _min_kernel,
        out_shape=jax.ShapeDtypeStruct((rows, cols), a.dtype),
        grid_spec=pltpu.PrefetchScalarGridSpec(
            num_scalar_prefetch=0,
            grid=grid,
            in_specs=[
                pl.BlockSpec((block_rows, cols), lambda i: (i, 0)),
                pl.BlockSpec((block_rows, cols), lambda i: (i, 0)),
            ],
            out_specs=pl.BlockSpec((block_rows, cols), lambda i: (i, 0)),
        ),
        compiler_params=pltpu.CompilerParams(
            dimension_semantics=("parallel",),     # megacore split on v7x
            vmem_limit_bytes=48 * 1024 * 1024,     # 3 arrays x 2 bufs x 4 MiB fits w/ headroom
        ),
    )(a2, b2)

    return out.reshape(orig_shape)


if __name__ == "__main__":
    key = jax.random.PRNGKey(0)
    ka, kb = jax.random.split(key)

    # Module-scale test shape (2,4,16,16): force the Pallas kernel path.
    shape = (2, 4, 16, 16)
    a = jax.random.normal(ka, shape, dtype=jnp.float32)
    b = jax.random.normal(kb, shape, dtype=jnp.float32)
    out = jax.block_until_ready(simple_min(a, b, small_fallback_elems=0))
    ref = jnp.minimum(a + a, b + b)
    assert out.shape == ref.shape and out.dtype == ref.dtype
    assert bool(jnp.allclose(out, ref)), "mismatch vs reference (kernel, 1 step)"

    # Same shape through the default path (small -> fused XLA fallback).
    out_d = jax.block_until_ready(simple_min(a, b))
    assert bool(jnp.allclose(out_d, ref)), "mismatch vs reference (fallback)"

    # Aligned shape with rows >= 2*sublane -> multi-step grid (megacore split).
    shape3 = (16, 2048)
    a3 = jax.random.normal(ka, shape3, dtype=jnp.float32)
    b3 = jax.random.normal(kb, shape3, dtype=jnp.float32)
    out3 = jax.block_until_ready(simple_min(a3, b3, small_fallback_elems=0))
    ref3 = jnp.minimum(a3 + a3, b3 + b3)
    assert out3.shape == ref3.shape and out3.dtype == ref3.dtype
    assert bool(jnp.allclose(out3, ref3)), "mismatch vs reference (kernel, 2 steps)"

    # Odd, non-128-divisible size exercises the no-pad fallback path.
    shape2 = (3, 5, 7)
    a2 = jax.random.normal(ka, shape2, dtype=jnp.float32)
    b2 = jax.random.normal(kb, shape2, dtype=jnp.float32)
    out2 = jax.block_until_ready(simple_min(a2, b2))
    ref2 = jnp.minimum(a2 + a2, b2 + b2)
    assert out2.shape == ref2.shape and out2.dtype == ref2.dtype
    assert bool(jnp.allclose(out2, ref2)), "mismatch vs reference (odd shape)"

    print("KERNEL_OK")
</pallas_src>

<mosaic_0001>
module attributes {stable_mosaic.version = 11 : i64} {
  func.func @_min_kernel(%arg0: i32, %arg1: memref<1x2048xf32, #tpu.memory_space<vmem>>, %arg2: memref<1x2048xf32, #tpu.memory_space<vmem>>, %arg3: memref<1x2048xf32, #tpu.memory_space<vmem>>) attributes {dimension_semantics = [#tpu.dimension_semantics<parallel>], iteration_bounds = array<i64: 1>, scalar_prefetch = 0 : i64, scratch_operands = 0 : i64, tpu.core_type = #tpu.core_type<tc>, window_params = [{transform_indices = @transform_0, window_bounds = array<i64: 1, 2048>}, {transform_indices = @transform_1, window_bounds = array<i64: 1, 2048>}, {transform_indices = @transform_2, window_bounds = array<i64: 1, 2048>}]} {
    %c0 = arith.constant 0 : index
    %c0_0 = arith.constant 0 : index
    %0 = vector.load %arg1[%c0, %c0_0] : memref<1x2048xf32, #tpu.memory_space<vmem>>, vector<1x2048xf32>
    %c0_1 = arith.constant 0 : index
    %c0_2 = arith.constant 0 : index
    %1 = vector.load %arg2[%c0_1, %c0_2] : memref<1x2048xf32, #tpu.memory_space<vmem>>, vector<1x2048xf32>
    %2 = arith.addf %0, %0 : vector<1x2048xf32>
    %3 = arith.addf %1, %1 : vector<1x2048xf32>
    %4 = arith.minimumf %2, %3 : vector<1x2048xf32>
    %c0_3 = arith.constant 0 : index
    %c0_4 = arith.constant 0 : index
    %5 = vector.load %arg3[%c0_3, %c0_4] : memref<1x2048xf32, #tpu.memory_space<vmem>>, vector<1x2048xf32>
    tpu.vector_store %arg3[%c0_3, %c0_4], %4 {strides = array<i32>} : memref<1x2048xf32, #tpu.memory_space<vmem>>, vector<1x2048xf32>,
    return
  }
  func.func @transform_0(%arg0: i32) -> (i32, i32) {
    %c0_i32 = arith.constant 0 : i32
    %c0_i32_0 = arith.constant 0 : i32
    return %arg0, %c0_i32 : i32, i32
  }
  func.func @transform_1(%arg0: i32) -> (i32, i32) {
    %c0_i32 = arith.constant 0 : i32
    %c0_i32_0 = arith.constant 0 : i32
    return %arg0, %c0_i32 : i32, i32
  }
  func.func @transform_2(%arg0: i32) -> (i32, i32) {
    %c0_i32 = arith.constant 0 : i32
    %c0_i32_0 = arith.constant 0 : i32
    return %arg0, %c0_i32 : i32, i32
  }
}

</mosaic_0001>

<llo_original>
// kernel: tpu_custom_call.1
$region0: #{tpu_custom_call.1}
  #allocation0 [shape = 'u32[]', space=smem, size = 0x4, offset = 0x4, fixed_abs, tag = 'smem constant byte address 0x4 - core index']
  #allocation1 [shape = 'u32[144,128]{1,0:T(1,128)}', space=vmem, size = 0x12000, scoped, tag = 'internal scratch']
  %s0 = inlined_call_operand.hbm [shape: f32[1,2048], index: 0, kind: input, shape index: {}]
  %s1 = inlined_call_operand.hbm [shape: f32[1,2048], index: 1, kind: input, shape index: {}]
  %s2 = inlined_call_operand.hbm [shape: f32[1,2048], index: 2, kind: output, shape index: {}]
  %s3 = sld [smem:[#allocation0]]
  $region26: #{tpu_custom_call.1} parent=0
    _
  %s5 = ssub.s32 1, %s3
  %s6 = scalar_select 0, %s5, %s3
  $region1: #{tpu_custom_call.1} parent=0
    #allocation2 [shape = 'u8[8192]{0}', space=vmem, size = 0x2000, scoped, tag = 'input window, operand 0, single buffered']
    #allocation3 [shape = 's32[1]{0}', space=sflag, size = 0x4, scoped, tag = 'scoped memory for tpu_custom_call.1']
    #allocation4 [shape = 's32[1]{0}', space=sflag, size = 0x4, scoped, tag = 'scoped memory for tpu_custom_call.1']
    #allocation5 [shape = 'u8[8192]{0}', space=vmem, size = 0x2000, scoped, tag = 'input window, operand 1, single buffered']
    #allocation6 [shape = 's32[1]{0}', space=sflag, size = 0x4, scoped, tag = 'scoped memory for tpu_custom_call.1']
    #allocation7 [shape = 'u8[8192]{0}', space=vmem, size = 0x2000, scoped, tag = 'output window, operand 0, single buffered']
    %7 = vsyncpa [#allocation3], 0
    %8 = vsyncpa [#allocation6], 0
    %9 = vsyncpa [#allocation4], 0
    // Predicated region
    $region2: #{tpu_custom_call.1} parent=1 // pred_check
      _
    $region3: #{tpu_custom_call.1} parent=1 // pred_check_branch
      %11 = sbr.rel (0) target = $region5
    $region4: #{tpu_custom_call.1} parent=1 // pred_region
      %s13 = ssub.s32 256, 256
      %14 = vsyncadd [#allocation3], %s13
      %s16 = sshll.u32 [#allocation2], 4
      %s17 = int_to_ptr.vmem [resolvable:$true] %s16
      %19 = dma.hbm_to_vmem [thread:$0]  %s0, 256, %s17, [#allocation3]
    $region5: #{tpu_custom_call.1} parent=1 // pred_fallthru
      _
    // Predicated region
    $region6: #{tpu_custom_call.1} parent=1 // pred_check
      _
    $region7: #{tpu_custom_call.1} parent=1 // pred_check_branch
      %21 = sbr.rel (0) target = $region9
    $region8: #{tpu_custom_call.1} parent=1 // pred_region
      %s23 = ssub.s32 256, 256
      %24 = vsyncadd [#allocation6], %s23
      %s26 = sshll.u32 [#allocation5], 4
      %s27 = int_to_ptr.vmem [resolvable:$true] %s26
      %29 = dma.hbm_to_vmem [thread:$0]  %s1, 256, %s27, [#allocation6]
    $region9: #{tpu_custom_call.1} parent=1 // pred_fallthru
      _
    // Predicated region
    $region10: #{tpu_custom_call.1} parent=1 // pred_check
      _
    $region11: #{tpu_custom_call.1} parent=1 // pred_check_branch
      %31 = sbr.rel (0) target = $region13
    $region12: #{tpu_custom_call.1} parent=1 // pred_region
      %32 = dma.done [#allocation3], 256
    $region13: #{tpu_custom_call.1} parent=1 // pred_fallthru
      _
    // Predicated region
    $region14: #{tpu_custom_call.1} parent=1 // pred_check
      _
    $region15: #{tpu_custom_call.1} parent=1 // pred_check_branch
      %34 = sbr.rel (0) target = $region17
    $region16: #{tpu_custom_call.1} parent=1 // pred_region
      %35 = dma.done [#allocation6], 256
    $region17: #{tpu_custom_call.1} parent=1 // pred_fallthru
      _
    %v36 = vld [vmem:[#allocation2] sm:$0xff]
    %v37 = vld [vmem:[#allocation2 + $0x8] sm:$0xff]
    %v38 = vld [vmem:[#allocation5] sm:$0xff]
    %v39 = vld [vmem:[#allocation5 + $0x8] sm:$0xff]
    %v40 = vadd.f32 %v36, %v36
    %v41 = vadd.f32 %v37, %v37
    %v42 = vadd.f32 %v38, %v38
    %v43 = vadd.f32 %v39, %v39
    %v44 = vmin.f32 %v40, %v42
    %v45 = vmin.f32 %v41, %v43
    %46 = vst [vmem:[#allocation7] sm:$0xff] %v44
    %47 = vst [vmem:[#allocation7 + $0x8] sm:$0xff] %v45
    // Predicated region
    $region18: #{tpu_custom_call.1} parent=1 // pred_check
      _
    $region19: #{tpu_custom_call.1} parent=1 // pred_check_branch
      %49 = sbr.rel (0) target = $region21
    $region20: #{tpu_custom_call.1} parent=1 // pred_region
      %s51 = ssub.s32 256, 256
      %52 = vsyncadd [#allocation4], %s51
      %s54 = sshll.u32 [#allocation7], 4
      %s55 = int_to_ptr.vmem [resolvable:$true] %s54
      %57 = dma.vmem_to_hbm [thread:$0]  %s55, 256, %s2, [#allocation4]
    $region21: #{tpu_custom_call.1} parent=1 // pred_fallthru
      _
    // Predicated region
    $region22: #{tpu_custom_call.1} parent=1 // pred_check
      _
    $region23: #{tpu_custom_call.1} parent=1 // pred_check_branch
      %59 = sbr.rel (0) target = $region25
    $region24: #{tpu_custom_call.1} parent=1 // pred_region
      %60 = dma.done [#allocation4], 256
    $region25: #{tpu_custom_call.1} parent=1 // pred_fallthru
      _
    %61 = vsyncpa [#allocation3], 1
    %62 = vsyncpa [#allocation6], 1
    %63 = vsyncpa [#allocation4], 1

</llo_original>
